<compile_context>
chip_gen: v5e
topology: v5e:2x2
jax: 0.10.0
libtpu: 0.0.40
codegen_flags: <defaults>
</compile_context>

<pallas_src>
import functools
import math

import jax
import jax.numpy as jnp
from jax.experimental import pallas as pl
from jax.experimental.pallas import tpu as pltpu


def _largest_tile(total, quantum, cap):
    """Largest multiple of `quantum` dividing `total` and <= cap; falls back to `total`."""
    best = None
    for t in range(quantum, min(total, cap) + 1, quantum):
        if total % t == 0:
            best = t
    return best if best is not None else total


def conv_stats_kernel(x_ref, w_ref, sum_ref, sq_ref, *, TL):
    """Per-tap conv matmuls (f32 accumulator) + BN per-channel sum / sum-of-squares.

    No conv output is written to HBM: pass 2 recomputes the conv.
    The conv bias is omitted (it cancels exactly under train-mode BatchNorm).
    """
    l = pl.program_id(1)
    NB, _, C_in = x_ref.shape
    K, _, C_out = w_ref.shape

    base = l * TL
    if TL % 8 == 0:
        base = pl.multiple_of(base, 8)

    # K shifted windows of the padded input, each a tile-aligned per-tap matmul
    # accumulated in f32 (no lane-axis concatenate / im2col relayout).
    acc = jnp.zeros((NB * TL, C_out), jnp.float32)
    for k in range(K):
        tap = x_ref[:, pl.ds(base + k, TL), :].reshape(NB * TL, C_in)
        acc += jnp.dot(tap, w_ref[k], preferred_element_type=jnp.float32)

    # BatchNorm1d (training mode) statistics, resident accumulator across the l axis.
    @pl.when(l == 0)
    def _init():
        sum_ref[...] = jnp.zeros_like(sum_ref)
        sq_ref[...] = jnp.zeros_like(sq_ref)

    sum_ref[...] += jnp.sum(acc, axis=0, keepdims=True)[None]        # (1, 1, C_out)
    sq_ref[...] += jnp.sum(acc * acc, axis=0, keepdims=True)[None]


def conv_bn_relu_pool_kernel(x_ref, w_ref, scale_ref, shift_ref, o_ref, z_ref,
                             *, TLo, pool):
    """Recompute conv tile, fuse hoisted BN affine + ReLU + MaxPool1d, store NCL tile."""
    j = pl.program_id(1)
    NB, _, C_in = x_ref.shape
    K, _, C_out = w_ref.shape
    TLc = TLo * pool

    base = j * TLc
    if TLc % 8 == 0:
        base = pl.multiple_of(base, 8)

    acc = jnp.zeros((NB * TLc, C_out), jnp.float32)
    for k in range(K):
        tap = x_ref[:, pl.ds(base + k, TLc), :].reshape(NB * TLc, C_in)
        acc += jnp.dot(tap, w_ref[k], preferred_element_type=jnp.float32)

    # Hoisted BN affine (scale/shift precomputed in the wrapper) + ReLU, then stage in VMEM
    # scratch so the pool can read sublane-strided phases.
    z = jnp.maximum(acc * scale_ref[...] + shift_ref[...], 0.0)
    z_ref[...] = z.reshape(NB, TLc, C_out)

    pooled = z_ref[:, pl.ds(0, TLo, stride=pool), :]                  # (NB, TLo, C_out)
    for p in range(1, pool):
        pooled = jnp.maximum(pooled, z_ref[:, pl.ds(p, TLo, stride=pool), :])

    # Single batched transpose -> lane-dense NCL output tile (length axis on lanes).
    o_ref[...] = jnp.swapaxes(pooled, 1, 2).astype(o_ref.dtype)


def conv_block_forward(x, w, b, gamma, beta, *, padding=1, pool=2, eps=1e-5,
                       compute_dtype=jnp.float32, block_n=1, block_l=None,
                       block_lout=None):
    """x: (N, C_in, L) float32 (PyTorch NCL). Returns (N, C_out, L_conv // pool) float32."""
    del b  # conv bias cancels exactly under train-mode BatchNorm (batch-mean subtraction)
    N, C_in, L = x.shape
    C_out, C_in_w, K = w.shape
    assert C_in_w == C_in
    L_conv = L + 2 * padding - K + 1
    L_out = L_conv // pool            # MaxPool1d floor semantics (ceil_mode=False)
    Lp = L + 2 * padding

    NB = block_n
    assert N % NB == 0
    TL = block_l if block_l is not None else _largest_tile(L_conv, 8, 1024)
    assert L_conv % TL == 0
    TLo = block_lout if block_lout is not None else _largest_tile(L_out, 128, 512)
    assert L_out % TLo == 0
    grid_n = N // NB
    grid_l = L_conv // TL
    grid_lo = L_out // TLo

    # Wrapper glue: NCL -> NLC, pad the length axis, optional compute-dtype cast.
    x_pad = jnp.pad(jnp.transpose(x, (0, 2, 1)),
                    ((0, 0), (padding, padding), (0, 0))).astype(compute_dtype)
    # Per-tap weight layout: w_taps[k] = w[:, :, k].T  -> (K, C_in, C_out)
    w_taps = jnp.transpose(w, (2, 1, 0)).astype(compute_dtype)

    vmem_budget = 40 * 1024 * 1024    # conservative: fits v7x's 64 MiB physical VMEM

    # ---- Pass 1: BN batch statistics only (resident accumulator along l, no conv HBM
    #      intermediate) ----
    s_sum, s_sq = pl.pallas_call(
        functools.partial(conv_stats_kernel, TL=TL),
        grid=(grid_n, grid_l),
        in_specs=[
            pl.BlockSpec((NB, Lp, C_in), lambda n, l: (n, 0, 0)),
            pl.BlockSpec((K, C_in, C_out), lambda n, l: (0, 0, 0)),
        ],
        out_specs=[
            pl.BlockSpec((1, 1, C_out), lambda n, l: (n, 0, 0)),     # resident across l
            pl.BlockSpec((1, 1, C_out), lambda n, l: (n, 0, 0)),
        ],
        out_shape=[
            jax.ShapeDtypeStruct((grid_n, 1, C_out), jnp.float32),
            jax.ShapeDtypeStruct((grid_n, 1, C_out), jnp.float32),
        ],
        compiler_params=pltpu.CompilerParams(
            dimension_semantics=("parallel", "arbitrary"),
            vmem_limit_bytes=vmem_budget),
    )(x_pad, w_taps)

    # BN training-mode batch statistics (biased variance) folded with gamma/beta into one
    # per-channel scale/shift.  C_out-sized math -> negligible, plain JAX.
    cnt = float(N * L_conv)
    mean = jnp.sum(s_sum, axis=0) / cnt                               # (1, C_out)
    var = jnp.maximum(jnp.sum(s_sq, axis=0) / cnt - mean * mean, 0.0)
    inv = jax.lax.rsqrt(var + eps)
    scale = gamma.reshape(1, C_out).astype(jnp.float32) * inv
    shift = beta.reshape(1, C_out).astype(jnp.float32) - mean * scale
    # TODO(synk): BatchNorm1d running_mean/running_var buffer updates (a training-time
    # state side effect) are not produced; the train-mode forward output does not need them.

    # ---- Pass 2: recompute conv + affine + ReLU + MaxPool, lane-dense NCL output ----
    out = pl.pallas_call(
        functools.partial(conv_bn_relu_pool_kernel, TLo=TLo, pool=pool),
        grid=(grid_n, grid_lo),
        in_specs=[
            pl.BlockSpec((NB, Lp, C_in), lambda n, j: (n, 0, 0)),
            pl.BlockSpec((K, C_in, C_out), lambda n, j: (0, 0, 0)),
            pl.BlockSpec((1, C_out), lambda n, j: (0, 0)),
            pl.BlockSpec((1, C_out), lambda n, j: (0, 0)),
        ],
        out_specs=pl.BlockSpec((NB, C_out, TLo), lambda n, j: (n, 0, j)),
        out_shape=jax.ShapeDtypeStruct((N, C_out, L_out), jnp.float32),
        scratch_shapes=[pltpu.VMEM((NB, TLo * pool, C_out), jnp.float32)],
        compiler_params=pltpu.CompilerParams(
            dimension_semantics=("parallel", "parallel"),
            vmem_limit_bytes=vmem_budget),
    )(x_pad, w_taps, scale, shift)

    return out


def conv_block_reference(x, w, b, gamma, beta, *, padding=1, pool=2, eps=1e-5):
    """Pure-JAX reference for correctness checking (PyTorch train-mode forward)."""
    y = jax.lax.conv_general_dilated(
        x, w, window_strides=(1,), padding=[(padding, padding)],
        dimension_numbers=('NCH', 'OIH', 'NCH'))
    y = y + b[None, :, None]
    mean = jnp.mean(y, axis=(0, 2), keepdims=True)
    var = jnp.mean((y - mean) ** 2, axis=(0, 2), keepdims=True)
    y = (y - mean) * jax.lax.rsqrt(var + eps) * gamma[None, :, None] + beta[None, :, None]
    y = jnp.maximum(y, 0.0)
    N, C, Lc = y.shape
    y = y[:, :, : (Lc // pool) * pool].reshape(N, C, Lc // pool, pool)
    return jnp.max(y, axis=-1)


if __name__ == "__main__":
    N, C_in, C_out, L, K = 2, 4, 8, 16, 3   # kernel_size=3, max_pool_factor=1.0 -> pool stride 2

    key = jax.random.PRNGKey(0)
    kx, kw, kg, kb = jax.random.split(key, 4)

    # Conv1d params: xavier_uniform_(gain=1.0) weight (maml_init_).  maml_init_ zeroes the
    # bias; a nonzero bias is used here to exercise the exact bias-cancellation under
    # train-mode BatchNorm that the kernel relies on.
    fan_in, fan_out = C_in * K, C_out * K
    bound = math.sqrt(6.0 / (fan_in + fan_out))
    w = jax.random.uniform(kw, (C_out, C_in, K), jnp.float32, minval=-bound, maxval=bound)
    b = 0.5 * jax.random.normal(kb, (C_out,), jnp.float32)
    # BatchNorm1d params: weight ~ U(0,1) (init.uniform_), bias = 0
    gamma = jax.random.uniform(kg, (C_out,), jnp.float32, minval=0.0, maxval=1.0)
    beta = jnp.zeros((C_out,), jnp.float32)

    x = jax.random.normal(kx, (N, C_in, L), jnp.float32)

    # block_n=1 -> grid_n=2 (even, feeds both v7x TensorCores at scale);
    # block_l=8 -> pass-1 grid (2, 2): exercises the resident BN-stats accumulator.
    fwd = jax.jit(functools.partial(conv_block_forward, block_n=1, block_l=8))
    out = jax.block_until_ready(fwd(x, w, b, gamma, beta))

    ref = conv_block_reference(x, w, b, gamma, beta)
    assert out.shape == (N, C_out, L // 2), out.shape
    if not bool(jnp.allclose(out, ref, atol=2e-2, rtol=2e-2)):
        raise AssertionError("Pallas kernel output does not match reference")

    print("KERNEL_OK")
</pallas_src>

<mosaic_0001>
module attributes {stable_mosaic.version = 11 : i64} {
  func.func @conv_stats_kernel(%arg0: i32, %arg1: i32, %arg2: memref<1x18x4xf32, #tpu.memory_space<vmem>>, %arg3: memref<3x4x8xf32, #tpu.memory_space<vmem>>, %arg4: memref<1x1x8xf32, #tpu.memory_space<vmem>>, %arg5: memref<1x1x8xf32, #tpu.memory_space<vmem>>) attributes {dimension_semantics = [#tpu.dimension_semantics<parallel>, #tpu.dimension_semantics<arbitrary>], iteration_bounds = array<i64: 2, 2>, scalar_prefetch = 0 : i64, scratch_operands = 0 : i64, tpu.core_type = #tpu.core_type<tc>, window_params = [{transform_indices = @transform_0, window_bounds = array<i64: 1, 18, 4>}, {pipeline_mode = #tpu.pipeline_mode<synchronous>, transform_indices = @transform_1, window_bounds = array<i64: 3, 4, 8>}, {transform_indices = @transform_2, window_bounds = array<i64: 1, 1, 8>}, {transform_indices = @transform_3, window_bounds = array<i64: 1, 1, 8>}]} {
    %c8_i32 = arith.constant 8 : i32
    %0 = arith.muli %arg1, %c8_i32 : i32
    %1 = tpu.assume_multiple %0, 8 : i32
    %cst = arith.constant 0.000000e+00 : f32
    %2 = vector.broadcast %cst : f32 to vector<8x8xf32>
    %c0_i32 = arith.constant 0 : i32
    %3 = arith.addi %1, %c0_i32 : i32
    %c0 = arith.constant 0 : index
    %4 = arith.index_cast %3 : i32 to index
    %c0_0 = arith.constant 0 : index
    %5 = vector.load %arg2[%c0, %4, %c0_0] : memref<1x18x4xf32, #tpu.memory_space<vmem>>, vector<1x8x4xf32>
    %6 = vector.shape_cast %5 : vector<1x8x4xf32> to vector<8x4xf32>
    %c0_1 = arith.constant 0 : index
    %c0_2 = arith.constant 0 : index
    %c0_3 = arith.constant 0 : index
    %7 = vector.load %arg3[%c0_1, %c0_2, %c0_3] : memref<3x4x8xf32, #tpu.memory_space<vmem>>, vector<1x4x8xf32>
    %8 = vector.shape_cast %7 : vector<1x4x8xf32> to vector<4x8xf32>
    %cst_4 = arith.constant dense<0.000000e+00> : vector<8x8xf32>
    %9 = tpu.matmul %6, %8, %cst_4 {dimension_numbers = #tpu.dot_dimension_numbers<[1], [0], [0], [1], [0, 0, 1, 1], [], []>} : vector<8x4xf32>, vector<4x8xf32>, vector<8x8xf32> -> vector<8x8xf32>
    %10 = arith.addf %2, %9 : vector<8x8xf32>
    %c1_i32 = arith.constant 1 : i32
    %11 = arith.addi %1, %c1_i32 : i32
    %c0_5 = arith.constant 0 : index
    %12 = arith.index_cast %11 : i32 to index
    %c0_6 = arith.constant 0 : index
    %13 = vector.load %arg2[%c0_5, %12, %c0_6] : memref<1x18x4xf32, #tpu.memory_space<vmem>>, vector<1x8x4xf32>
    %14 = vector.shape_cast %13 : vector<1x8x4xf32> to vector<8x4xf32>
    %c1 = arith.constant 1 : index
    %c0_7 = arith.constant 0 : index
    %c0_8 = arith.constant 0 : index
    %15 = vector.load %arg3[%c1, %c0_7, %c0_8] : memref<3x4x8xf32, #tpu.memory_space<vmem>>, vector<1x4x8xf32>
    %16 = vector.shape_cast %15 : vector<1x4x8xf32> to vector<4x8xf32>
    %cst_9 = arith.constant dense<0.000000e+00> : vector<8x8xf32>
    %17 = tpu.matmul %14, %16, %cst_9 {dimension_numbers = #tpu.dot_dimension_numbers<[1], [0], [0], [1], [0, 0, 1, 1], [], []>} : vector<8x4xf32>, vector<4x8xf32>, vector<8x8xf32> -> vector<8x8xf32>
    %18 = arith.addf %10, %17 : vector<8x8xf32>
    %c2_i32 = arith.constant 2 : i32
    %19 = arith.addi %1, %c2_i32 : i32
    %c0_10 = arith.constant 0 : index
    %20 = arith.index_cast %19 : i32 to index
    %c0_11 = arith.constant 0 : index
    %21 = vector.load %arg2[%c0_10, %20, %c0_11] : memref<1x18x4xf32, #tpu.memory_space<vmem>>, vector<1x8x4xf32>
    %22 = vector.shape_cast %21 : vector<1x8x4xf32> to vector<8x4xf32>
    %c2 = arith.constant 2 : index
    %c0_12 = arith.constant 0 : index
    %c0_13 = arith.constant 0 : index
    %23 = vector.load %arg3[%c2, %c0_12, %c0_13] : memref<3x4x8xf32, #tpu.memory_space<vmem>>, vector<1x4x8xf32>
    %24 = vector.shape_cast %23 : vector<1x4x8xf32> to vector<4x8xf32>
    %cst_14 = arith.constant dense<0.000000e+00> : vector<8x8xf32>
    %25 = tpu.matmul %22, %24, %cst_14 {dimension_numbers = #tpu.dot_dimension_numbers<[1], [0], [0], [1], [0, 0, 1, 1], [], []>} : vector<8x4xf32>, vector<4x8xf32>, vector<8x8xf32> -> vector<8x8xf32>
    %26 = arith.addf %18, %25 : vector<8x8xf32>
    %c0_i32_15 = arith.constant 0 : i32
    %27 = arith.cmpi eq, %arg1, %c0_i32_15 : i32
    %28 = arith.extui %27 : i1 to i32
    %c0_i32_16 = arith.constant 0 : i32
    %29 = arith.cmpi ne, %28, %c0_i32_16 : i32
    scf.if %29 {
      %cst_31 = arith.constant 0.000000e+00 : f32
      %43 = vector.broadcast %cst_31 : f32 to vector<1x1x8xf32>
      %c0_32 = arith.constant 0 : index
      %c0_33 = arith.constant 0 : index
      %c0_34 = arith.constant 0 : index
      %44 = vector.load %arg4[%c0_32, %c0_33, %c0_34] : memref<1x1x8xf32, #tpu.memory_space<vmem>>, vector<1x1x8xf32>
      tpu.vector_store %arg4[%c0_32, %c0_33, %c0_34], %43 {strides = array<i32>} : memref<1x1x8xf32, #tpu.memory_space<vmem>>, vector<1x1x8xf32>,
      %cst_35 = arith.constant 0.000000e+00 : f32
      %45 = vector.broadcast %cst_35 : f32 to vector<1x1x8xf32>
      %c0_36 = arith.constant 0 : index
      %c0_37 = arith.constant 0 : index
      %c0_38 = arith.constant 0 : index
      %46 = vector.load %arg5[%c0_36, %c0_37, %c0_38] : memref<1x1x8xf32, #tpu.memory_space<vmem>>, vector<1x1x8xf32>
      tpu.vector_store %arg5[%c0_36, %c0_37, %c0_38], %45 {strides = array<i32>} : memref<1x1x8xf32, #tpu.memory_space<vmem>>, vector<1x1x8xf32>,
    } else {
    }
    %c0_17 = arith.constant 0 : index
    %c0_18 = arith.constant 0 : index
    %c0_19 = arith.constant 0 : index
    %30 = vector.load %arg4[%c0_17, %c0_18, %c0_19] : memref<1x1x8xf32, #tpu.memory_space<vmem>>, vector<1x1x8xf32>
    %cst_20 = arith.constant dense<0.000000e+00> : vector<8xf32>
    %31 = vector.multi_reduction <add>, %26, %cst_20 [0] : vector<8x8xf32> to vector<8xf32>
    %32 = vector.shape_cast %31 : vector<8xf32> to vector<1x8xf32>
    %33 = vector.shape_cast %32 : vector<1x8xf32> to vector<1x1x8xf32>
    %34 = arith.addf %30, %33 : vector<1x1x8xf32>
    %c0_21 = arith.constant 0 : index
    %c0_22 = arith.constant 0 : index
    %c0_23 = arith.constant 0 : index
    %35 = vector.load %arg4[%c0_21, %c0_22, %c0_23] : memref<1x1x8xf32, #tpu.memory_space<vmem>>, vector<1x1x8xf32>
    tpu.vector_store %arg4[%c0_21, %c0_22, %c0_23], %34 {strides = array<i32>} : memref<1x1x8xf32, #tpu.memory_space<vmem>>, vector<1x1x8xf32>,
    %c0_24 = arith.constant 0 : index
    %c0_25 = arith.constant 0 : index
    %c0_26 = arith.constant 0 : index
    %36 = vector.load %arg5[%c0_24, %c0_25, %c0_26] : memref<1x1x8xf32, #tpu.memory_space<vmem>>, vector<1x1x8xf32>
    %37 = arith.mulf %26, %26 : vector<8x8xf32>
    %cst_27 = arith.constant dense<0.000000e+00> : vector<8xf32>
    %38 = vector.multi_reduction <add>, %37, %cst_27 [0] : vector<8x8xf32> to vector<8xf32>
    %39 = vector.shape_cast %38 : vector<8xf32> to vector<1x8xf32>
    %40 = vector.shape_cast %39 : vector<1x8xf32> to vector<1x1x8xf32>
    %41 = arith.addf %36, %40 : vector<1x1x8xf32>
    %c0_28 = arith.constant 0 : index
    %c0_29 = arith.constant 0 : index
    %c0_30 = arith.constant 0 : index
    %42 = vector.load %arg5[%c0_28, %c0_29, %c0_30] : memref<1x1x8xf32, #tpu.memory_space<vmem>>, vector<1x1x8xf32>
    tpu.vector_store %arg5[%c0_28, %c0_29, %c0_30], %41 {strides = array<i32>} : memref<1x1x8xf32, #tpu.memory_space<vmem>>, vector<1x1x8xf32>,
    return
  }
  func.func @transform_0(%arg0: i32, %arg1: i32) -> (i32, i32, i32) {
    %c0_i32 = arith.constant 0 : i32
    %c0_i32_0 = arith.constant 0 : i32
    %c0_i32_1 = arith.constant 0 : i32
    return %arg0, %c0_i32, %c0_i32_0 : i32, i32, i32
  }
  func.func @transform_1(%arg0: i32, %arg1: i32) -> (i32, i32, i32) {
    %c0_i32 = arith.constant 0 : i32
    %c0_i32_0 = arith.constant 0 : i32
    %c0_i32_1 = arith.constant 0 : i32
    %c0_i32_2 = arith.constant 0 : i32
    return %c0_i32, %c0_i32_0, %c0_i32_1 : i32, i32, i32
  }
  func.func @transform_2(%arg0: i32, %arg1: i32) -> (i32, i32, i32) {
    %c0_i32 = arith.constant 0 : i32
    %c0_i32_0 = arith.constant 0 : i32
    %c0_i32_1 = arith.constant 0 : i32
    return %arg0, %c0_i32, %c0_i32_0 : i32, i32, i32
  }
  func.func @transform_3(%arg0: i32, %arg1: i32) -> (i32, i32, i32) {
    %c0_i32 = arith.constant 0 : i32
    %c0_i32_0 = arith.constant 0 : i32
    %c0_i32_1 = arith.constant 0 : i32
    return %arg0, %c0_i32, %c0_i32_0 : i32, i32, i32
  }
}

module attributes {stable_mosaic.version = 11 : i64} {
  func.func @conv_bn_relu_pool_kernel(%arg0: i32, %arg1: i32, %arg2: memref<1x18x4xf32, #tpu.memory_space<vmem>>, %arg3: memref<3x4x8xf32, #tpu.memory_space<vmem>>, %arg4: memref<1x8xf32, #tpu.memory_space<vmem>>, %arg5: memref<1x8xf32, #tpu.memory_space<vmem>>, %arg6: memref<1x8x8xf32, #tpu.memory_space<vmem>>, %arg7: memref<1x16x8xf32, #tpu.memory_space<vmem>>) attributes {dimension_semantics = [#tpu.dimension_semantics<parallel>, #tpu.dimension_semantics<parallel>], iteration_bounds = array<i64: 2, 1>, scalar_prefetch = 0 : i64, scratch_operands = 1 : i64, tpu.core_type = #tpu.core_type<tc>, window_params = [{transform_indices = @transform_0, window_bounds = array<i64: 1, 18, 4>}, {pipeline_mode = #tpu.pipeline_mode<synchronous>, transform_indices = @transform_1, window_bounds = array<i64: 3, 4, 8>}, {pipeline_mode = #tpu.pipeline_mode<synchronous>, transform_indices = @transform_2, window_bounds = array<i64: 1, 8>}, {pipeline_mode = #tpu.pipeline_mode<synchronous>, transform_indices = @transform_3, window_bounds = array<i64: 1, 8>}, {transform_indices = @transform_4, window_bounds = array<i64: 1, 8, 8>}]} {
    %c16_i32 = arith.constant 16 : i32
    %0 = arith.muli %arg1, %c16_i32 : i32
    %1 = tpu.assume_multiple %0, 8 : i32
    %cst = arith.constant 0.000000e+00 : f32
    %2 = vector.broadcast %cst : f32 to vector<16x8xf32>
    %c0_i32 = arith.constant 0 : i32
    %3 = arith.addi %1, %c0_i32 : i32
    %c0 = arith.constant 0 : index
    %4 = arith.index_cast %3 : i32 to index
    %c0_0 = arith.constant 0 : index
    %5 = vector.load %arg2[%c0, %4, %c0_0] : memref<1x18x4xf32, #tpu.memory_space<vmem>>, vector<1x16x4xf32>
    %6 = vector.shape_cast %5 : vector<1x16x4xf32> to vector<16x4xf32>
    %c0_1 = arith.constant 0 : index
    %c0_2 = arith.constant 0 : index
    %c0_3 = arith.constant 0 : index
    %7 = vector.load %arg3[%c0_1, %c0_2, %c0_3] : memref<3x4x8xf32, #tpu.memory_space<vmem>>, vector<1x4x8xf32>
    %8 = vector.shape_cast %7 : vector<1x4x8xf32> to vector<4x8xf32>
    %cst_4 = arith.constant dense<0.000000e+00> : vector<16x8xf32>
    %9 = tpu.matmul %6, %8, %cst_4 {dimension_numbers = #tpu.dot_dimension_numbers<[1], [0], [0], [1], [0, 0, 1, 1], [], []>} : vector<16x4xf32>, vector<4x8xf32>, vector<16x8xf32> -> vector<16x8xf32>
    %10 = arith.addf %2, %9 : vector<16x8xf32>
    %c1_i32 = arith.constant 1 : i32
    %11 = arith.addi %1, %c1_i32 : i32
    %c0_5 = arith.constant 0 : index
    %12 = arith.index_cast %11 : i32 to index
    %c0_6 = arith.constant 0 : index
    %13 = vector.load %arg2[%c0_5, %12, %c0_6] : memref<1x18x4xf32, #tpu.memory_space<vmem>>, vector<1x16x4xf32>
    %14 = vector.shape_cast %13 : vector<1x16x4xf32> to vector<16x4xf32>
    %c1 = arith.constant 1 : index
    %c0_7 = arith.constant 0 : index
    %c0_8 = arith.constant 0 : index
    %15 = vector.load %arg3[%c1, %c0_7, %c0_8] : memref<3x4x8xf32, #tpu.memory_space<vmem>>, vector<1x4x8xf32>
    %16 = vector.shape_cast %15 : vector<1x4x8xf32> to vector<4x8xf32>
    %cst_9 = arith.constant dense<0.000000e+00> : vector<16x8xf32>
    %17 = tpu.matmul %14, %16, %cst_9 {dimension_numbers = #tpu.dot_dimension_numbers<[1], [0], [0], [1], [0, 0, 1, 1], [], []>} : vector<16x4xf32>, vector<4x8xf32>, vector<16x8xf32> -> vector<16x8xf32>
    %18 = arith.addf %10, %17 : vector<16x8xf32>
    %c2_i32 = arith.constant 2 : i32
    %19 = arith.addi %1, %c2_i32 : i32
    %c0_10 = arith.constant 0 : index
    %20 = arith.index_cast %19 : i32 to index
    %c0_11 = arith.constant 0 : index
    %21 = vector.load %arg2[%c0_10, %20, %c0_11] : memref<1x18x4xf32, #tpu.memory_space<vmem>>, vector<1x16x4xf32>
    %22 = vector.shape_cast %21 : vector<1x16x4xf32> to vector<16x4xf32>
    %c2 = arith.constant 2 : index
    %c0_12 = arith.constant 0 : index
    %c0_13 = arith.constant 0 : index
    %23 = vector.load %arg3[%c2, %c0_12, %c0_13] : memref<3x4x8xf32, #tpu.memory_space<vmem>>, vector<1x4x8xf32>
    %24 = vector.shape_cast %23 : vector<1x4x8xf32> to vector<4x8xf32>
    %cst_14 = arith.constant dense<0.000000e+00> : vector<16x8xf32>
    %25 = tpu.matmul %22, %24, %cst_14 {dimension_numbers = #tpu.dot_dimension_numbers<[1], [0], [0], [1], [0, 0, 1, 1], [], []>} : vector<16x4xf32>, vector<4x8xf32>, vector<16x8xf32> -> vector<16x8xf32>
    %26 = arith.addf %18, %25 : vector<16x8xf32>
    %c0_15 = arith.constant 0 : index
    %c0_16 = arith.constant 0 : index
    %27 = vector.load %arg4[%c0_15, %c0_16] : memref<1x8xf32, #tpu.memory_space<vmem>>, vector<1x8xf32>
    %28 = vector.broadcast %27 : vector<1x8xf32> to vector<16x8xf32>
    %29 = arith.mulf %26, %28 : vector<16x8xf32>
    %c0_17 = arith.constant 0 : index
    %c0_18 = arith.constant 0 : index
    %30 = vector.load %arg5[%c0_17, %c0_18] : memref<1x8xf32, #tpu.memory_space<vmem>>, vector<1x8xf32>
    %31 = vector.broadcast %30 : vector<1x8xf32> to vector<16x8xf32>
    %32 = arith.addf %29, %31 : vector<16x8xf32>
    %cst_19 = arith.constant 0.000000e+00 : f32
    %33 = vector.broadcast %cst_19 : f32 to vector<16x8xf32>
    %34 = arith.maximumf %32, %33 : vector<16x8xf32>
    %35 = vector.shape_cast %34 : vector<16x8xf32> to vector<1x16x8xf32>
    %c0_20 = arith.constant 0 : index
    %c0_21 = arith.constant 0 : index
    %c0_22 = arith.constant 0 : index
    %36 = vector.load %arg7[%c0_20, %c0_21, %c0_22] : memref<1x16x8xf32, #tpu.memory_space<vmem>>, vector<1x16x8xf32>
    tpu.vector_store %arg7[%c0_20, %c0_21, %c0_22], %35 {strides = array<i32>} : memref<1x16x8xf32, #tpu.memory_space<vmem>>, vector<1x16x8xf32>,
    %c0_23 = arith.constant 0 : index
    %c0_24 = arith.constant 0 : index
    %c0_25 = arith.constant 0 : index
    %37 = tpu.strided_load %arg7[%c0_23, %c0_24, %c0_25] {strides = array<i32: 1, 2, 1>} : memref<1x16x8xf32, #tpu.memory_space<vmem>>, vector<1x8x8xf32>
    %c0_26 = arith.constant 0 : index
    %c1_27 = arith.constant 1 : index
    %c0_28 = arith.constant 0 : index
    %38 = tpu.strided_load %arg7[%c0_26, %c1_27, %c0_28] {strides = array<i32: 1, 2, 1>} : memref<1x16x8xf32, #tpu.memory_space<vmem>>, vector<1x8x8xf32>
    %39 = arith.maximumf %37, %38 : vector<1x8x8xf32>
    %40 = tpu.transpose %39, [0, 2, 1] : vector<1x8x8xf32> -> vector<1x8x8xf32>
    %c0_29 = arith.constant 0 : index
    %c0_30 = arith.constant 0 : index
    %c0_31 = arith.constant 0 : index
    %41 = vector.load %arg6[%c0_29, %c0_30, %c0_31] : memref<1x8x8xf32, #tpu.memory_space<vmem>>, vector<1x8x8xf32>
    tpu.vector_store %arg6[%c0_29, %c0_30, %c0_31], %40 {strides = array<i32>} : memref<1x8x8xf32, #tpu.memory_space<vmem>>, vector<1x8x8xf32>,
    return
  }
  func.func @transform_0(%arg0: i32, %arg1: i32) -> (i32, i32, i32) {
    %c0_i32 = arith.constant 0 : i32
    %c0_i32_0 = arith.constant 0 : i32
    %c0_i32_1 = arith.constant 0 : i32
    return %arg0, %c0_i32, %c0_i32_0 : i32, i32, i32
  }
  func.func @transform_1(%arg0: i32, %arg1: i32) -> (i32, i32, i32) {
    %c0_i32 = arith.constant 0 : i32
    %c0_i32_0 = arith.constant 0 : i32
    %c0_i32_1 = arith.constant 0 : i32
    %c0_i32_2 = arith.constant 0 : i32
    return %c0_i32, %c0_i32_0, %c0_i32_1 : i32, i32, i32
  }
  func.func @transform_2(%arg0: i32, %arg1: i32) -> (i32, i32) {
    %c0_i32 = arith.constant 0 : i32
    %c0_i32_0 = arith.constant 0 : i32
    %c0_i32_1 = arith.constant 0 : i32
    return %c0_i32, %c0_i32_0 : i32, i32
  }
  func.func @transform_3(%arg0: i32, %arg1: i32) -> (i32, i32) {
    %c0_i32 = arith.constant 0 : i32
    %c0_i32_0 = arith.constant 0 : i32
    %c0_i32_1 = arith.constant 0 : i32
    return %c0_i32, %c0_i32_0 : i32, i32
  }
  func.func @transform_4(%arg0: i32, %arg1: i32) -> (i32, i32, i32) {
    %c0_i32 = arith.constant 0 : i32
    %c0_i32_0 = arith.constant 0 : i32
    return %arg0, %c0_i32, %arg1 : i32, i32, i32
  }
}

</mosaic_0001>

<llo_original>
// kernel: conv_block_forward.2
$region0: #{conv_block_forward.2}
  #allocation0 [shape = 'u32[]', space=smem, size = 0x4, offset = 0x4, fixed_abs, tag = 'smem constant byte address 0x4 - core index']
  #allocation1 [shape = 'u32[72,128]{1,0:T(1,128)}', space=vmem, size = 0x9000, scoped, tag = 'internal scratch']
  %s0 = inlined_call_operand.vmem [shape: f32[2,18,4], index: 0, kind: input, shape index: {}]
  %s1 = inlined_call_operand.vmem [shape: f32[3,4,8], index: 1, kind: input, shape index: {}]
  %s2 = inlined_call_operand.vmem [shape: f32[2,1,8], index: 2, kind: output, shape index: {0}]
  %s3 = inlined_call_operand.vmem [shape: f32[2,1,8], index: 3, kind: output, shape index: {1}]
  %4 = xla_tuple %s2, %s3
  %s5 = sld [smem:[#allocation0]]
  $region53: #{conv_block_forward.2} parent=0
    _
  %s7 = ssub.s32 1, %s5
  %s8 = scalar_select 0, %s7, %s5
  loop: start=0, step=1, limit=6
  $region2: #{conv_block_forward.2} parent=0 // loop_pre_header
    _
  $region3: #{conv_block_forward.2} parent=0 // loop_header
    %s10 = sphi 0, %s14
    %p11 = scmp.ge.s32.totalorder %s10, 6
    %s17 = sphi 0, %s29
    %s18 = sphi 0, %s25
    %s19 = sphi 0, %s17
    %s20 = sphi 0, %s18
    %s21 = sphi 0, %s19
    %s22 = sphi 0, %s20
    %s32 = sphi 0, %s34
    %s35 = sphi 0, %s32
    %s36 = sphi 0, %s35
    %s52 = sphi 0, %s36
    %s56 = sphi 0, %s56
    %s58 = sphi 0, %s56
    %s59 = sphi 0, %s58
    %s73 = sphi 0, %s59
    %s79 = sphi 0, %s81
    %s82 = sphi 0, %s79
    %s83 = sphi 0, %s82
    %s99 = sphi 0, %s83
    %s105 = sphi 0, %s107
    %s108 = sphi 0, %s105
    %s109 = sphi 0, %s108
    %s125 = sphi 0, %s109
  $region4: #{conv_block_forward.2} parent=0 // loop_header_branch
    %13 = sbr.rel (%p11) target = $region8
  $region5: #{conv_block_forward.2} parent=0 // loop_body
    %s15 = ssub.s32 %s10, 1
    %s16 = ssub.s32 %s10, 2
    %s23 = sadd.s32 1, %s18
    %p24 = scmp.ge.s32.totalorder %s23, 2
    %s25 = scalar_select %p24, 0, %s23
    %s26 = sadd.s32 1, %s17
    %s27 = scalar_select %p24, %s26, %s17
    %p28 = scmp.ge.s32.totalorder %s27, 2
    %s29 = scalar_select %p28, 0, %s27
    %s30 = ssub.s32 %s17, %s29
    %p31 = scmp.eq.s32.totalorder %s30, 0
    %s33 = sadd.s32 %s32, 1
    %s34 = scalar_select %p31, %s32, %s33
    %p37 = pneg %p31
    %p38 = scmp.eq.s32.totalorder %s10, 3
    %p39 = por %p37, %p38
    %p40 = scmp.ne.s32.totalorder %s32, %s35
    %p41 = scmp.eq.s32.totalorder %s10, 0
    %p42 = por %p40, %p41
    %p43 = scmp.ne.s32.totalorder %s32, %s35
    %p44 = scmp.eq.s32.totalorder %s15, 3
    %p45 = por %p43, %p44
    %p46 = scmp.ne.s32.totalorder %s35, %s36
    %p47 = scmp.eq.s32.totalorder %s15, 0
    %p48 = por %p46, %p47
    %p49 = scmp.ne.s32.totalorder %s35, %s36
    %p50 = scmp.eq.s32.totalorder %s16, 3
    %p51 = por %p49, %p50
    %p53 = scmp.ne.s32.totalorder %s36, %s52
    %p54 = scmp.eq.s32.totalorder %s16, 0
    %p55 = por %p53, %p54
    %s57 = sadd.s32 %s56, 1
    %p60 = scmp.eq.s32.totalorder %s10, 3
    %p61 = scmp.ne.s32.totalorder %s56, %s58
    %p62 = scmp.eq.s32.totalorder %s10, 0
    %p63 = por %p61, %p62
    %p64 = scmp.ne.s32.totalorder %s56, %s58
    %p65 = scmp.eq.s32.totalorder %s15, 3
    %p66 = por %p64, %p65
    %p67 = scmp.ne.s32.totalorder %s58, %s59
    %p68 = scmp.eq.s32.totalorder %s15, 0
    %p69 = por %p67, %p68
    %p70 = scmp.ne.s32.totalorder %s58, %s59
    %p71 = scmp.eq.s32.totalorder %s16, 3
    %p72 = por %p70, %p71
    %p74 = scmp.ne.s32.totalorder %s59, %s73
    %p75 = scmp.eq.s32.totalorder %s16, 0
    %p76 = por %p74, %p75
    %s77 = ssub.s32 %s17, %s29
    %p78 = scmp.eq.s32.totalorder %s77, 0
    %s80 = sadd.s32 %s79, 1
    %s81 = scalar_select %p78, %s79, %s80
    %p84 = pneg %p78
    %p85 = scmp.eq.s32.totalorder %s10, 3
    %p86 = por %p84, %p85
    %p87 = scmp.ne.s32.totalorder %s79, %s82
    %p88 = scmp.eq.s32.totalorder %s10, 0
    %p89 = por %p87, %p88
    %p90 = scmp.ne.s32.totalorder %s79, %s82
    %p91 = scmp.eq.s32.totalorder %s15, 3
    %p92 = por %p90, %p91
    %p93 = scmp.ne.s32.totalorder %s82, %s83
    %p94 = scmp.eq.s32.totalorder %s15, 0
    %p95 = por %p93, %p94
    %p96 = scmp.ne.s32.totalorder %s82, %s83
    %p97 = scmp.eq.s32.totalorder %s16, 3
    %p98 = por %p96, %p97
    %p100 = scmp.ne.s32.totalorder %s83, %s99
    %p101 = scmp.eq.s32.totalorder %s16, 0
    %p102 = por %p100, %p101
    %s103 = ssub.s32 %s17, %s29
    %p104 = scmp.eq.s32.totalorder %s103, 0
    %s106 = sadd.s32 %s105, 1
    %s107 = scalar_select %p104, %s105, %s106
    %p110 = pneg %p104
    %p111 = scmp.eq.s32.totalorder %s10, 3
    %p112 = por %p110, %p111
    %p113 = scmp.ne.s32.totalorder %s105, %s108
    %p114 = scmp.eq.s32.totalorder %s10, 0
    %p115 = por %p113, %p114
    %p116 = scmp.ne.s32.totalorder %s105, %s108
    %p117 = scmp.eq.s32.totalorder %s15, 3
    %p118 = por %p116, %p117
    %p119 = scmp.ne.s32.totalorder %s108, %s109
    %p120 = scmp.eq.s32.totalorder %s15, 0
    %p121 = por %p119, %p120
    %p122 = scmp.ne.s32.totalorder %s108, %s109
    %p123 = scmp.eq.s32.totalorder %s16, 3
    %p124 = por %p122, %p123
    %p126 = scmp.ne.s32.totalorder %s109, %s125
    %p127 = scmp.eq.s32.totalorder %s16, 0
    %p128 = por %p126, %p127
    %p129 = scmp.le.s32.totalorder 1, %s10
    %p130 = scmp.lt.s32.totalorder %s10, 5
    %p131 = pnand %p129, %p130
    %p132 = pneg %p131
    // Predicated region
    $region9: #{conv_block_forward.2} parent=5 // pred_check
      _
    $region10: #{conv_block_forward.2} parent=5 // pred_check_branch
      %134 = sbr.rel (%p131) target = $region12
    $region11: #{conv_block_forward.2} parent=5 // pred_region
      %s135 = ssub.s32 %s10, 1
      // Predicated region
      $region13: #{conv_block_forward.2} parent=11 // pred_check
        %p136 = pneg %p69
      $region14: #{conv_block_forward.2} parent=11 // pred_check_branch
        %138 = sbr.rel (%p136) target = $region16
      $region15: #{conv_block_forward.2} parent=11 // pred_region
        _
      $region16: #{conv_block_forward.2} parent=11 // pred_fallthru
        _
    $region12: #{conv_block_forward.2} parent=5 // pred_fallthru
      _
    %p139 = scmp.lt.s32.totalorder %s10, 4
    // Predicated region
    $region17: #{conv_block_forward.2} parent=5 // pred_check
      %p140 = pneg %p139
    $region18: #{conv_block_forward.2} parent=5 // pred_check_branch
      %142 = sbr.rel (%p140) target = $region20
    $region19: #{conv_block_forward.2} parent=5 // pred_region
      // Predicated region
      $region21: #{conv_block_forward.2} parent=19 // pred_check
        %p143 = pneg %p42
      $region22: #{conv_block_forward.2} parent=19 // pred_check_branch
        %145 = sbr.rel (%p143) target = $region24
      $region23: #{conv_block_forward.2} parent=19 // pred_region
        %p146 = scmp.lt.s32.totalorder %s17, 1
        %s147 = scalar_select %p146, %s17, 1
        %s148 = smul.addr %s147, 3
        %s149 = smul.addr %s148, 8
        %s150 = scalar_lea.vmem %s0, %s149
      $region24: #{conv_block_forward.2} parent=19 // pred_fallthru
        _
    $region20: #{conv_block_forward.2} parent=5 // pred_fallthru
      _
    %p151 = scmp.le.s32.totalorder 1, %s10
    %p152 = scmp.lt.s32.totalorder %s10, 5
    %p153 = pnand %p151, %p152
    %p154 = pneg %p153
    // Predicated region
    $region25: #{conv_block_forward.2} parent=5 // pred_check
      _
    $region26: #{conv_block_forward.2} parent=5 // pred_check_branch
      %156 = sbr.rel (%p153) target = $region28
    $region27: #{conv_block_forward.2} parent=5 // pred_region
      %s157 = ssub.s32 %s10, 1
      %p158 = scmp.lt.s32.totalorder %s19, 1
      %s159 = scalar_select %p158, %s19, 1
      %s160 = smul.addr %s159, 3
      %s161 = smul.addr %s160, 8
      %s162 = scalar_lea.vmem %s0, %s161
      %p163 = pneg %p48
      %p164 = pneg %p45
      %p165 = pneg %p69
      %p166 = pneg %p66
      %p167 = pneg %p95
      %p168 = pneg %p92
      %p169 = scmp.lt.s32.totalorder %s19, 1
      %s170 = scalar_select %p169, %s19, 1
      %s171 = scalar_lea.vmem %s2, %s170
      %p172 = pneg %p121
      %p173 = pneg %p118
      %p174 = scmp.lt.s32.totalorder %s19, 1
      %s175 = scalar_select %p174, %s19, 1
      %s176 = scalar_lea.vmem %s3, %s175
      %p177 = scmp.lt.s32.totalorder %s19, 1
      %s178 = scalar_select %p177, %s19, 1
      %s179 = smul.addr %s178, 3
      %s180 = smul.addr %s179, 8
      %s181 = scalar_lea.vmem %s0, %s180
      %p182 = scmp.lt.s32.totalorder %s19, 1
      %s183 = scalar_select %p182, %s19, 1
      %s184 = scalar_lea.vmem %s2, %s183
      %p185 = scmp.lt.s32.totalorder %s19, 1
      %s186 = scalar_select %p185, %s19, 1
      %s187 = scalar_lea.vmem %s3, %s186
      %s188 = smul.u32 %s20, 8
      %s189 = scalar_lea.vmem %s181, %s188
      %v190 = vld [vmem:[%s189] sm:$0xff]
      %v191 = vld [vmem:[%s1] sm:$0xf]
      %s192 = sadd.s32 %s188, 1
      %s193 = scalar_lea.vmem %s181, %s192
      %v194 = vld [vmem:[%s193] sm:$0xff]
      %s195 = scalar_lea.vmem %s1, 4
      %v196 = vld [vmem:[%s195] sm:$0xf]
      %vm197 = vcmask 31744
      %v199 = vsel %vm197, %v194, 0
      %vm201 = vcmask 1043456
      %v203 = vsel %vm201, %v196, 0
      %205 = vmatpush.msra.mxu0 0.0
      %206 = vmatpush.msra.mxu0 0.0
      %207 = vmatpush.msra.mxu0 0.0
      %208 = vmatpush.msra.mxu0 0.0
      %209 = vmatpush.msra.mxu0 0.0
      %210 = vmatpush.msra.mxu0 0.0
      %211 = vmatpush.msra.mxu0 0.0
      %212 = vmatpush.msra.mxu0 0.0
      %213 = vmatpush.msra.mxu0 0.0
      %214 = vmatpush.msra.mxu0 0.0
      %215 = vmatpush.msra.mxu0 0.0
      %216 = vmatpush.msra.mxu0 0.0
      %217 = vmatpush.msra.mxu0 0.0
      %218 = vmatpush.msra.mxu0 0.0
      %219 = vmatpush.msra.mxu0 0.0
      %220 = vmatpush.msra.mxu0 %v203
      %221 = vmatmul.f32.gmra.mxu0 %v199
      %v222 = vpop.f32.mrf.mxu0
      %v223 = vadd.f32 0.0, %v222
      %224 = vdwg.mxu0
      %v226 = vsel %vm197, %v190, 0
      %v229 = vsel %vm201, %v191, 0
      %231 = vmatpush.msra.mxu0 0.0
      %232 = vmatpush.msra.mxu0 0.0
      %233 = vmatpush.msra.mxu0 0.0
      %234 = vmatpush.msra.mxu0 0.0
      %235 = vmatpush.msra.mxu0 0.0
      %236 = vmatpush.msra.mxu0 0.0
      %237 = vmatpush.msra.mxu0 0.0
      %238 = vmatpush.msra.mxu0 0.0
      %239 = vmatpush.msra.mxu0 0.0
      %240 = vmatpush.msra.mxu0 0.0
      %241 = vmatpush.msra.mxu0 0.0
      %242 = vmatpush.msra.mxu0 0.0
      %243 = vmatpush.msra.mxu0 0.0
      %244 = vmatpush.msra.mxu0 0.0
      %245 = vmatpush.msra.mxu0 0.0
      %246 = vmatpush.msra.mxu0 %v229
      %247 = vmatmul.f32.gmra.mxu0 %v226
      %v248 = vpop.f32.mrf.mxu0
      %v249 = vadd.f32 %v223, %v248
      %250 = vdwg.mxu0
      %s251 = sadd.s32 %s188, 2
      %s252 = scalar_lea.vmem %s181, %s251
      %v253 = vld [vmem:[%s252] sm:$0xff]
      %s254 = scalar_lea.vmem %s1, 8
      %v255 = vld [vmem:[%s254] sm:$0xf]
      %v257 = vsel %vm197, %v253, 0
      %v260 = vsel %vm201, %v255, 0
      %262 = vmatpush.msra.mxu0 0.0
      %263 = vmatpush.msra.mxu0 0.0
      %264 = vmatpush.msra.mxu0 0.0
      %265 = vmatpush.msra.mxu0 0.0
      %266 = vmatpush.msra.mxu0 0.0
      %267 = vmatpush.msra.mxu0 0.0
      %268 = vmatpush.msra.mxu0 0.0
      %269 = vmatpush.msra.mxu0 0.0
      %270 = vmatpush.msra.mxu0 0.0
      %271 = vmatpush.msra.mxu0 0.0
      %272 = vmatpush.msra.mxu0 0.0
      %273 = vmatpush.msra.mxu0 0.0
      %274 = vmatpush.msra.mxu0 0.0
      %275 = vmatpush.msra.mxu0 0.0
      %276 = vmatpush.msra.mxu0 0.0
      %277 = vmatpush.msra.mxu0 %v260
      %278 = vmatmul.f32.gmra.mxu0 %v257
      %v279 = vpop.f32.mrf.mxu0
      %v280 = vadd.f32 0.0, %v279
      %281 = vdwg.mxu0
      %v282 = vadd.f32 %v249, %v280
      %p283 = scmp.eq.s32.totalorder %s20, 0
      // Predicated region
      $region29: #{conv_block_forward.2} parent=27 // pred_check
        %p284 = pneg %p283
      $region30: #{conv_block_forward.2} parent=27 // pred_check_branch
        %286 = sbr.rel (%p284) target = $region32
      $region31: #{conv_block_forward.2} parent=27 // pred_region
        %vm287 = vcmask 57344
        %288 = vst.msk [vmem:[%s184] sm:$0x1] %vm287, 0.0
        %289 = vst.msk [vmem:[%s187] sm:$0x1] %vm287, 0.0
      $region32: #{conv_block_forward.2} parent=27 // pred_fallthru
        _
      %v290 = vld [vmem:[%s184] sm:$0x1]
      %vm291 = vcmask 64512
      %v292 = vsel %vm291, %v282, 0.0
      %v293 = vrot.slane %v292, 4
      %v294 = vadd.f32 %v292, %v293
      %v295 = vrot.slane %v294, 2
      %v296 = vadd.f32 %v294, %v295
      %v297 = vrot.slane %v296, 1
      %v298 = vadd.f32 %v296, %v297
      %v299 = vadd.f32 %v290, %v298
      %vm300 = vcmask 57344
      %301 = vst.msk [vmem:[%s184] sm:$0x1] %vm300, %v299
      %v302 = vld [vmem:[%s187] sm:$0x1]
      %v303 = vmul.f32 %v282, %v282
      %v304 = vsel %vm291, %v303, 0.0
      %v305 = vrot.slane %v304, 4
      %v306 = vadd.f32 %v304, %v305
      %v307 = vrot.slane %v306, 2
      %v308 = vadd.f32 %v306, %v307
      %v309 = vrot.slane %v308, 1
      %v310 = vadd.f32 %v308, %v309
      %v311 = vadd.f32 %v302, %v310
      %312 = vst.msk [vmem:[%s187] sm:$0x1] %vm300, %v311
      %p313 = scmp.lt.s32.totalorder %s19, 1
      %s314 = scalar_select %p313, %s19, 1
      %s315 = scalar_lea.vmem %s2, %s314
      %p316 = scmp.lt.s32.totalorder %s19, 1
      %s317 = scalar_select %p316, %s19, 1
      %s318 = scalar_lea.vmem %s3, %s317
      // Predicated region
      $region33: #{conv_block_forward.2} parent=27 // pred_check
        %p319 = pneg %p92
      $region34: #{conv_block_forward.2} parent=27 // pred_check_branch
        %321 = sbr.rel (%p319) target = $region36
      $region35: #{conv_block_forward.2} parent=27 // pred_region
        _
      $region36: #{conv_block_forward.2} parent=27 // pred_fallthru
        _
      // Predicated region
      $region37: #{conv_block_forward.2} parent=27 // pred_check
        %p322 = pneg %p118
      $region38: #{conv_block_forward.2} parent=27 // pred_check_branch
        %324 = sbr.rel (%p322) target = $region40
      $region39: #{conv_block_forward.2} parent=27 // pred_region
        _
      $region40: #{conv_block_forward.2} parent=27 // pred_fallthru
        _
    $region28: #{conv_block_forward.2} parent=5 // pred_fallthru
      _
    %p325 = scmp.le.s32.totalorder 2, %s10
    // Predicated region
    $region41: #{conv_block_forward.2} parent=5 // pred_check
      %p326 = pneg %p325
    $region42: #{conv_block_forward.2} parent=5 // pred_check_branch
      %328 = sbr.rel (%p326) target = $region44
    $region43: #{conv_block_forward.2} parent=5 // pred_region
      %s329 = ssub.s32 %s10, 2
      // Predicated region
      $region45: #{conv_block_forward.2} parent=43 // pred_check
        %p330 = pneg %p98
      $region46: #{conv_block_forward.2} parent=43 // pred_check_branch
        %332 = sbr.rel (%p330) target = $region48
      $region47: #{conv_block_forward.2} parent=43 // pred_region
        %p333 = scmp.lt.s32.totalorder %s21, 1
        %s334 = scalar_select %p333, %s21, 1
        %s335 = scalar_lea.vmem %s2, %s334
      $region48: #{conv_block_forward.2} parent=43 // pred_fallthru
        _
      // Predicated region
      $region49: #{conv_block_forward.2} parent=43 // pred_check
        %p336 = pneg %p124
      $region50: #{conv_block_forward.2} parent=43 // pred_check_branch
        %338 = sbr.rel (%p336) target = $region52
      $region51: #{conv_block_forward.2} parent=43 // pred_region
        %p339 = scmp.lt.s32.totalorder %s21, 1
        %s340 = scalar_select %p339, %s21, 1
        %s341 = scalar_lea.vmem %s3, %s340
      $region52: #{conv_block_forward.2} parent=43 // pred_fallthru
        _
    $region44: #{conv_block_forward.2} parent=5 // pred_fallthru
      _
  $region6: #{conv_block_forward.2} parent=0 // loop_footer
    %s14 = sadd.s32 1, %s10
  $region7: #{conv_block_forward.2} parent=0 // loop_footer_branch
    %9 = sbr.rel target = $region3
  $region8: #{conv_block_forward.2} parent=0 // loop_exit
    _

// kernel: conv_block_forward.3
$region0: #{conv_block_forward.3}
  #allocation0 [shape = 'u32[]', space=smem, size = 0x4, offset = 0x4, fixed_abs, tag = 'smem constant byte address 0x4 - core index']
  #allocation1 [shape = 'u32[72,128]{1,0:T(1,128)}', space=vmem, size = 0x9000, scoped, tag = 'internal scratch']
  #allocation2 [shape = 'f32[1,16,8]{2,1,0:T(8,128)}', space=vmem, size = 0x2000, scoped, tag = 'scratch operand']
  %s0 = inlined_call_operand.vmem [shape: f32[2,18,4], index: 0, kind: input, shape index: {}]
  %s1 = inlined_call_operand.vmem [shape: f32[3,4,8], index: 1, kind: input, shape index: {}]
  %s2 = inlined_call_operand.vmem [shape: f32[1,8], index: 2, kind: input, shape index: {}]
  %s3 = inlined_call_operand.vmem [shape: f32[1,8], index: 3, kind: input, shape index: {}]
  %s4 = inlined_call_operand.hbm [shape: f32[2,8,8], index: 4, kind: output, shape index: {}]
  %s5 = sld [smem:[#allocation0]]
  $region49: #{conv_block_forward.3} parent=0
    _
  %s7 = ssub.s32 1, %s5
  %s8 = scalar_select 0, %s7, %s5
  $region1: #{conv_block_forward.3} parent=0
    #allocation3 [shape = 'u8[8192]{0}', space=vmem, size = 0x2000, scoped, tag = 'output window, operand 0']
    #allocation4 [shape = 's32[2]{0}', space=sflag, size = 0x8, scoped, tag = 'scoped memory for conv_block_forward.3']
    %9 = vsyncpa [#allocation4], 0
    %s10 = scalar_lea.sflag [#allocation4], 1
    %11 = vsyncpa %s10, 0
    loop: start=0, step=1, limit=4
    $region2: #{conv_block_forward.3} parent=1 // loop_pre_header
      _
    $region3: #{conv_block_forward.3} parent=1 // loop_header
      %s13 = sphi 0, %s17
      %p14 = scmp.ge.s32.totalorder %s13, 4
      %s20 = sphi 0, %s32
      %s21 = sphi 0, %s28
      %s22 = sphi 0, %s20
      %s23 = sphi 0, %s21
      %s24 = sphi 0, %s22
      %s25 = sphi 0, %s23
      %s35 = sphi 0, %s37
      %s38 = sphi 0, %s35
      %s39 = sphi 0, %s38
      %s55 = sphi 0, %s39
      %s59 = sphi 0, %s59
      %s61 = sphi 0, %s59
      %s62 = sphi 0, %s61
      %s76 = sphi 0, %s62
      %s80 = sphi 0, %s80
      %s82 = sphi 0, %s80
      %s83 = sphi 0, %s82
      %s97 = sphi 0, %s83
      %s101 = sphi 0, %s101
      %s103 = sphi 0, %s101
      %s104 = sphi 0, %s103
      %s118 = sphi 0, %s104
      %s126 = sphi 0, %s128
      %s129 = sphi 0, %s126
      %s130 = sphi 0, %s129
      %s146 = sphi 0, %s130
    $region4: #{conv_block_forward.3} parent=1 // loop_header_branch
      %16 = sbr.rel (%p14) target = $region8
    $region5: #{conv_block_forward.3} parent=1 // loop_body
      %s18 = ssub.s32 %s13, 1
      %s19 = ssub.s32 %s13, 2
      %s26 = sadd.s32 1, %s21
      %p27 = scmp.ge.s32.totalorder %s26, 1
      %s28 = scalar_select %p27, 0, %s26
      %s29 = sadd.s32 1, %s20
      %s30 = scalar_select %p27, %s29, %s20
      %p31 = scmp.ge.s32.totalorder %s30, 2
      %s32 = scalar_select %p31, 0, %s30
      %s33 = ssub.s32 %s20, %s32
      %p34 = scmp.eq.s32.totalorder %s33, 0
      %s36 = sadd.s32 %s35, 1
      %s37 = scalar_select %p34, %s35, %s36
      %p40 = pneg %p34
      %p41 = scmp.eq.s32.totalorder %s13, 1
      %p42 = por %p40, %p41
      %p43 = scmp.ne.s32.totalorder %s35, %s38
      %p44 = scmp.eq.s32.totalorder %s13, 0
      %p45 = por %p43, %p44
      %p46 = scmp.ne.s32.totalorder %s35, %s38
      %p47 = scmp.eq.s32.totalorder %s18, 1
      %p48 = por %p46, %p47
      %p49 = scmp.ne.s32.totalorder %s38, %s39
      %p50 = scmp.eq.s32.totalorder %s18, 0
      %p51 = por %p49, %p50
      %p52 = scmp.ne.s32.totalorder %s38, %s39
      %p53 = scmp.eq.s32.totalorder %s19, 1
      %p54 = por %p52, %p53
      %p56 = scmp.ne.s32.totalorder %s39, %s55
      %p57 = scmp.eq.s32.totalorder %s19, 0
      %p58 = por %p56, %p57
      %s60 = sadd.s32 %s59, 1
      %p63 = scmp.eq.s32.totalorder %s13, 1
      %p64 = scmp.ne.s32.totalorder %s59, %s61
      %p65 = scmp.eq.s32.totalorder %s13, 0
      %p66 = por %p64, %p65
      %p67 = scmp.ne.s32.totalorder %s59, %s61
      %p68 = scmp.eq.s32.totalorder %s18, 1
      %p69 = por %p67, %p68
      %p70 = scmp.ne.s32.totalorder %s61, %s62
      %p71 = scmp.eq.s32.totalorder %s18, 0
      %p72 = por %p70, %p71
      %p73 = scmp.ne.s32.totalorder %s61, %s62
      %p74 = scmp.eq.s32.totalorder %s19, 1
      %p75 = por %p73, %p74
      %p77 = scmp.ne.s32.totalorder %s62, %s76
      %p78 = scmp.eq.s32.totalorder %s19, 0
      %p79 = por %p77, %p78
      %s81 = sadd.s32 %s80, 1
      %p84 = scmp.eq.s32.totalorder %s13, 1
      %p85 = scmp.ne.s32.totalorder %s80, %s82
      %p86 = scmp.eq.s32.totalorder %s13, 0
      %p87 = por %p85, %p86
      %p88 = scmp.ne.s32.totalorder %s80, %s82
      %p89 = scmp.eq.s32.totalorder %s18, 1
      %p90 = por %p88, %p89
      %p91 = scmp.ne.s32.totalorder %s82, %s83
      %p92 = scmp.eq.s32.totalorder %s18, 0
      %p93 = por %p91, %p92
      %p94 = scmp.ne.s32.totalorder %s82, %s83
      %p95 = scmp.eq.s32.totalorder %s19, 1
      %p96 = por %p94, %p95
      %p98 = scmp.ne.s32.totalorder %s83, %s97
      %p99 = scmp.eq.s32.totalorder %s19, 0
      %p100 = por %p98, %p99
      %s102 = sadd.s32 %s101, 1
      %p105 = scmp.eq.s32.totalorder %s13, 1
      %p106 = scmp.ne.s32.totalorder %s101, %s103
      %p107 = scmp.eq.s32.totalorder %s13, 0
      %p108 = por %p106, %p107
      %p109 = scmp.ne.s32.totalorder %s101, %s103
      %p110 = scmp.eq.s32.totalorder %s18, 1
      %p111 = por %p109, %p110
      %p112 = scmp.ne.s32.totalorder %s103, %s104
      %p113 = scmp.eq.s32.totalorder %s18, 0
      %p114 = por %p112, %p113
      %p115 = scmp.ne.s32.totalorder %s103, %s104
      %p116 = scmp.eq.s32.totalorder %s19, 1
      %p117 = por %p115, %p116
      %p119 = scmp.ne.s32.totalorder %s104, %s118
      %p120 = scmp.eq.s32.totalorder %s19, 0
      %p121 = por %p119, %p120
      %s122 = ssub.s32 %s20, %s32
      %s123 = ssub.s32 %s21, %s28
      %s124 = sor.u32 %s122, %s123
      %p125 = scmp.eq.s32.totalorder %s124, 0
      %s127 = sadd.s32 %s126, 1
      %s128 = scalar_select %p125, %s126, %s127
      %p131 = pneg %p125
      %p132 = scmp.eq.s32.totalorder %s13, 1
      %p133 = por %p131, %p132
      %p134 = scmp.ne.s32.totalorder %s126, %s129
      %p135 = scmp.eq.s32.totalorder %s13, 0
      %p136 = por %p134, %p135
      %p137 = scmp.ne.s32.totalorder %s126, %s129
      %p138 = scmp.eq.s32.totalorder %s18, 1
      %p139 = por %p137, %p138
      %p140 = scmp.ne.s32.totalorder %s129, %s130
      %p141 = scmp.eq.s32.totalorder %s18, 0
      %p142 = por %p140, %p141
      %p143 = scmp.ne.s32.totalorder %s129, %s130
      %p144 = scmp.eq.s32.totalorder %s19, 1
      %p145 = por %p143, %p144
      %p147 = scmp.ne.s32.totalorder %s130, %s146
      %p148 = scmp.eq.s32.totalorder %s19, 0
      %p149 = por %p147, %p148
      %p150 = scmp.le.s32.totalorder 1, %s13
      %p151 = scmp.lt.s32.totalorder %s13, 3
      %p152 = pnand %p150, %p151
      %p153 = pneg %p152
      // Predicated region
      $region9: #{conv_block_forward.3} parent=5 // pred_check
        _
      $region10: #{conv_block_forward.3} parent=5 // pred_check_branch
        %155 = sbr.rel (%p152) target = $region12
      $region11: #{conv_block_forward.3} parent=5 // pred_region
        %s156 = ssub.s32 %s13, 1
        // Predicated region
        $region13: #{conv_block_forward.3} parent=11 // pred_check
          %p157 = pneg %p72
        $region14: #{conv_block_forward.3} parent=11 // pred_check_branch
          %159 = sbr.rel (%p157) target = $region16
        $region15: #{conv_block_forward.3} parent=11 // pred_region
          _
        $region16: #{conv_block_forward.3} parent=11 // pred_fallthru
          _
        // Predicated region
        $region17: #{conv_block_forward.3} parent=11 // pred_check
          %p160 = pneg %p93
        $region18: #{conv_block_forward.3} parent=11 // pred_check_branch
          %162 = sbr.rel (%p160) target = $region20
        $region19: #{conv_block_forward.3} parent=11 // pred_region
          _
        $region20: #{conv_block_forward.3} parent=11 // pred_fallthru
          _
        // Predicated region
        $region21: #{conv_block_forward.3} parent=11 // pred_check
          %p163 = pneg %p114
        $region22: #{conv_block_forward.3} parent=11 // pred_check_branch
          %165 = sbr.rel (%p163) target = $region24
        $region23: #{conv_block_forward.3} parent=11 // pred_region
          _
        $region24: #{conv_block_forward.3} parent=11 // pred_fallthru
          _
      $region12: #{conv_block_forward.3} parent=5 // pred_fallthru
        _
      %p166 = scmp.lt.s32.totalorder %s13, 2
      // Predicated region
      $region25: #{conv_block_forward.3} parent=5 // pred_check
        %p167 = pneg %p166
      $region26: #{conv_block_forward.3} parent=5 // pred_check_branch
        %169 = sbr.rel (%p167) target = $region28
      $region27: #{conv_block_forward.3} parent=5 // pred_region
        // Predicated region
        $region29: #{conv_block_forward.3} parent=27 // pred_check
          %p170 = pneg %p45
        $region30: #{conv_block_forward.3} parent=27 // pred_check_branch
          %172 = sbr.rel (%p170) target = $region32
        $region31: #{conv_block_forward.3} parent=27 // pred_region
          %p173 = scmp.lt.s32.totalorder %s20, 1
          %s174 = scalar_select %p173, %s20, 1
          %s175 = smul.addr %s174, 3
          %s176 = smul.addr %s175, 8
          %s177 = scalar_lea.vmem %s0, %s176
        $region32: #{conv_block_forward.3} parent=27 // pred_fallthru
          _
      $region28: #{conv_block_forward.3} parent=5 // pred_fallthru
        _
      %p178 = scmp.le.s32.totalorder 1, %s13
      %p179 = scmp.lt.s32.totalorder %s13, 3
      %p180 = pnand %p178, %p179
      %p181 = pneg %p180
      // Predicated region
      $region33: #{conv_block_forward.3} parent=5 // pred_check
        _
      $region34: #{conv_block_forward.3} parent=5 // pred_check_branch
        %183 = sbr.rel (%p180) target = $region36
      $region35: #{conv_block_forward.3} parent=5 // pred_region
        %s184 = ssub.s32 %s13, 1
        %p185 = scmp.lt.s32.totalorder %s22, 1
        %s186 = scalar_select %p185, %s22, 1
        %s187 = smul.addr %s186, 3
        %s188 = smul.addr %s187, 8
        %s189 = scalar_lea.vmem %s0, %s188
        %p190 = pneg %p51
        %p191 = pneg %p48
        %p192 = pneg %p72
        %p193 = pneg %p69
        %p194 = pneg %p93
        %p195 = pneg %p90
        %p196 = pneg %p114
        %p197 = pneg %p111
        %p198 = pneg %p142
        %p199 = pneg %p139
        %s200 = sand.u32 %s129, 1
        %s201 = scalar_lea.sflag [#allocation4], %s200
        %s202 = sand.u32 %s129, 1
        %s203 = smul.addr %s202, 8
        %s204 = scalar_lea.vmem [#allocation3], %s203
        %p205 = scmp.lt.s32.totalorder %s22, 1
        %s206 = scalar_select %p205, %s22, 1
        %s207 = smul.addr %s206, 3
        %s208 = smul.addr %s207, 8
        %s209 = scalar_lea.vmem %s0, %s208
        %s210 = smul.u32 %s23, 16
        %s211 = scalar_lea.vmem %s209, %s210
        %v212 = vld [vmem:[%s211] sm:$0xff]
        %v213 = vld [vmem:[%s211 + $0x8] sm:$0xff]
        %v214 = vld [vmem:[%s1] sm:$0xf]
        %s215 = sadd.s32 %s210, 1
        %s216 = scalar_lea.vmem %s209, %s215
        %v217 = vld [vmem:[%s216] sm:$0xff]
        %v218 = vld [vmem:[%s216 + $0x8] sm:$0xff]
        %s219 = scalar_lea.vmem %s1, 4
        %v220 = vld [vmem:[%s219] sm:$0xf]
        %vm221 = vcmask 31744
        %v223 = vsel %vm221, %v217, 0
        %v226 = vsel %vm221, %v218, 0
        %vm228 = vcmask 1043456
        %v230 = vsel %vm228, %v220, 0
        %232 = vmatpush.msra.mxu0 0.0
        %233 = vmatpush.msra.mxu0 0.0
        %234 = vmatpush.msra.mxu0 0.0
        %235 = vmatpush.msra.mxu0 0.0
        %236 = vmatpush.msra.mxu0 0.0
        %237 = vmatpush.msra.mxu0 0.0
        %238 = vmatpush.msra.mxu0 0.0
        %239 = vmatpush.msra.mxu0 0.0
        %240 = vmatpush.msra.mxu0 0.0
        %241 = vmatpush.msra.mxu0 0.0
        %242 = vmatpush.msra.mxu0 0.0
        %243 = vmatpush.msra.mxu0 0.0
        %244 = vmatpush.msra.mxu0 0.0
        %245 = vmatpush.msra.mxu0 0.0
        %246 = vmatpush.msra.mxu0 0.0
        %247 = vmatpush.msra.mxu0 %v230
        %248 = vmatmul.f32.gmra.mxu0 %v223
        %v249 = vpop.f32.mrf.mxu0
        %v250 = vadd.f32 0.0, %v249
        %251 = vmatmul.f32.gmra.mxu0 %v226
        %v252 = vpop.f32.mrf.mxu0
        %v253 = vadd.f32 0.0, %v252
        %254 = vdwg.mxu0
        %v256 = vsel %vm221, %v212, 0
        %v259 = vsel %vm221, %v213, 0
        %v262 = vsel %vm228, %v214, 0
        %264 = vmatpush.msra.mxu0 0.0
        %265 = vmatpush.msra.mxu0 0.0
        %266 = vmatpush.msra.mxu0 0.0
        %267 = vmatpush.msra.mxu0 0.0
        %268 = vmatpush.msra.mxu0 0.0
        %269 = vmatpush.msra.mxu0 0.0
        %270 = vmatpush.msra.mxu0 0.0
        %271 = vmatpush.msra.mxu0 0.0
        %272 = vmatpush.msra.mxu0 0.0
        %273 = vmatpush.msra.mxu0 0.0
        %274 = vmatpush.msra.mxu0 0.0
        %275 = vmatpush.msra.mxu0 0.0
        %276 = vmatpush.msra.mxu0 0.0
        %277 = vmatpush.msra.mxu0 0.0
        %278 = vmatpush.msra.mxu0 0.0
        %279 = vmatpush.msra.mxu0 %v262
        %280 = vmatmul.f32.gmra.mxu0 %v256
        %v281 = vpop.f32.mrf.mxu0
        %v282 = vadd.f32 %v250, %v281
        %283 = vmatmul.f32.gmra.mxu0 %v259
        %v284 = vpop.f32.mrf.mxu0
        %v285 = vadd.f32 %v253, %v284
        %286 = vdwg.mxu0
        %s287 = sadd.s32 %s210, 2
        %s288 = scalar_lea.vmem %s209, %s287
        %v289 = vld [vmem:[%s288] sm:$0xff]
        %v290 = vld [vmem:[%s288 + $0x8] sm:$0xff]
        %s291 = scalar_lea.vmem %s1, 8
        %v292 = vld [vmem:[%s291] sm:$0xf]
        %v294 = vsel %vm221, %v289, 0
        %v297 = vsel %vm221, %v290, 0
        %v300 = vsel %vm228, %v292, 0
        %302 = vmatpush.msra.mxu0 0.0
        %303 = vmatpush.msra.mxu0 0.0
        %304 = vmatpush.msra.mxu0 0.0
        %305 = vmatpush.msra.mxu0 0.0
        %306 = vmatpush.msra.mxu0 0.0
        %307 = vmatpush.msra.mxu0 0.0
        %308 = vmatpush.msra.mxu0 0.0
        %309 = vmatpush.msra.mxu0 0.0
        %310 = vmatpush.msra.mxu0 0.0
        %311 = vmatpush.msra.mxu0 0.0
        %312 = vmatpush.msra.mxu0 0.0
        %313 = vmatpush.msra.mxu0 0.0
        %314 = vmatpush.msra.mxu0 0.0
        %315 = vmatpush.msra.mxu0 0.0
        %316 = vmatpush.msra.mxu0 0.0
        %317 = vmatpush.msra.mxu0 %v300
        %318 = vmatmul.f32.gmra.mxu0 %v294
        %v319 = vpop.f32.mrf.mxu0
        %v320 = vadd.f32 0.0, %v319
        %321 = vmatmul.f32.gmra.mxu0 %v297
        %v322 = vpop.f32.mrf.mxu0
        %v323 = vadd.f32 0.0, %v322
        %324 = vdwg.mxu0
        %v325 = vadd.f32 %v282, %v320
        %v326 = vadd.f32 %v285, %v323
        %v327 = vld [vmem:[%s2] sm:$0x1]
        %v329 = vperm.slane %v327, 0
        %v331 = vmul.f32 %v325, %v329
        %v332 = vmul.f32 %v326, %v329
        %v333 = vld [vmem:[%s3] sm:$0x1]
        %v335 = vperm.slane %v333, 0
        %v337 = vadd.f32 %v331, %v335
        %v338 = vadd.f32 %v332, %v335
        %v339 = vmax.f32 %v337, 0.0
        %v340 = vmax.f32 %v338, 0.0
        %vm341 = vcmask 64512
        %342 = vst.msk [vmem:[#allocation2] sm:$0xff] %vm341, %v339
        %343 = vst.msk [vmem:[#allocation2 + $0x8] sm:$0xff] %vm341, %v340
        %v344 = vld [vmem:[#allocation2] ss:$2 sm:$0xff]
        %s345 = scalar_lea.vmem [#allocation2], 1
        %v346 = vld [vmem:[%s345] ss:$2 sm:$0xff]
        %v347 = vmax.f32 %v344, %v346
        %348 = vxpose.xlu0.b32.start [1/16] %v347, 128
        %349 = vxpose.xlu0.b32.cont [2/16] 0.0, 128
        %350 = vxpose.xlu0.b32.cont [3/16] 0.0, 128
        %351 = vxpose.xlu0.b32.cont [4/16] 0.0, 128
        %352 = vxpose.xlu0.b32.cont [5/16] 0.0, 128
        %353 = vxpose.xlu0.b32.cont [6/16] 0.0, 128
        %354 = vxpose.xlu0.b32.cont [7/16] 0.0, 128
        %355 = vxpose.xlu0.b32.cont [8/16] 0.0, 128
        %356 = vxpose.xlu0.b32.cont [9/16] 0.0, 128
        %357 = vxpose.xlu0.b32.cont [10/16] 0.0, 128
        %358 = vxpose.xlu0.b32.cont [11/16] 0.0, 128
        %359 = vxpose.xlu0.b32.cont [12/16] 0.0, 128
        %360 = vxpose.xlu0.b32.cont [13/16] 0.0, 128
        %361 = vxpose.xlu0.b32.cont [14/16] 0.0, 128
        %362 = vxpose.xlu0.b32.cont [15/16] 0.0, 128
        %363 = vxpose.xlu0.b32.end [16/16] 0.0, 128
        %v364 = vpop.trf.xlu0
        %v365 = vpop.trf.xlu0
        %v366 = vpop.trf.xlu0
        %v367 = vpop.trf.xlu0
        %v368 = vpop.trf.xlu0
        %v369 = vpop.trf.xlu0
        %v370 = vpop.trf.xlu0
        %v371 = vpop.trf.xlu0
        %v372 = vpop.trf.xlu0
        %v373 = vpop.trf.xlu0
        %v374 = vpop.trf.xlu0
        %v375 = vpop.trf.xlu0
        %v376 = vpop.trf.xlu0
        %v377 = vpop.trf.xlu0
        %v378 = vpop.trf.xlu0
        %v379 = vpop.trf.xlu0
        %380 = vst.msk [vmem:[%s204] sm:$0xff] %vm341, %v364
        %s381 = sand.u32 %s129, 1
        %s382 = scalar_lea.sflag [#allocation4], %s381
        %s383 = sand.u32 %s129, 1
        %s384 = smul.addr %s383, 8
        %s385 = scalar_lea.vmem [#allocation3], %s384
        // Predicated region
        $region37: #{conv_block_forward.3} parent=35 // pred_check
          %p386 = pneg %p139
        $region38: #{conv_block_forward.3} parent=35 // pred_check_branch
          %388 = sbr.rel (%p386) target = $region40
        $region39: #{conv_block_forward.3} parent=35 // pred_region
          %390 = vsyncadd %s382, 0
          %s391 = sadd.s32 %s23, %s22
          %s392 = smul.addr %s391, 8
          %s393 = scalar_lea.hbm %s4, %s392
          %s395 = sshll.u32 %s385, 4
          %s396 = int_to_ptr.vmem [resolvable:$true] %s395
          %s397 = sshll.u32 %s393, 4
          %s398 = int_to_ptr.hbm [resolvable:$true] %s397
          %400 = dma.vmem_to_hbm [thread:$0]  %s396, 128, %s398, %s382
        $region40: #{conv_block_forward.3} parent=35 // pred_fallthru
          _
      $region36: #{conv_block_forward.3} parent=5 // pred_fallthru
        _
      %p401 = scmp.le.s32.totalorder 2, %s13
      // Predicated region
      $region41: #{conv_block_forward.3} parent=5 // pred_check
        %p402 = pneg %p401
      $region42: #{conv_block_forward.3} parent=5 // pred_check_branch
        %404 = sbr.rel (%p402) target = $region44
      $region43: #{conv_block_forward.3} parent=5 // pred_region
        %s405 = ssub.s32 %s13, 2
        // Predicated region
        $region45: #{conv_block_forward.3} parent=43 // pred_check
          %p406 = pneg %p145
        $region46: #{conv_block_forward.3} parent=43 // pred_check_branch
          %408 = sbr.rel (%p406) target = $region48
        $region47: #{conv_block_forward.3} parent=43 // pred_region
          %s409 = sand.u32 %s130, 1
          %s410 = scalar_lea.sflag [#allocation4], %s409
          %s411 = sand.u32 %s130, 1
          %s412 = smul.addr %s411, 8
          %s413 = scalar_lea.vmem [#allocation3], %s412
          %415 = dma.done %s410, 128
        $region48: #{conv_block_forward.3} parent=43 // pred_fallthru
          _
      $region44: #{conv_block_forward.3} parent=5 // pred_fallthru
        _
    $region6: #{conv_block_forward.3} parent=1 // loop_footer
      %s17 = sadd.s32 1, %s13
    $region7: #{conv_block_forward.3} parent=1 // loop_footer_branch
      %12 = sbr.rel target = $region3
    $region8: #{conv_block_forward.3} parent=1 // loop_exit
      _
    %416 = vsyncpa [#allocation4], 1
    %s417 = scalar_lea.sflag [#allocation4], 1
    %418 = vsyncpa %s417, 1

</llo_original>
